<compile_context>
chip_gen: v5e
topology: v5e:2x2
jax: 0.10.0
libtpu: 0.0.40
codegen_flags: <defaults>
</compile_context>

<pallas_src>
import functools

import jax
import jax.numpy as jnp
from jax import lax
from jax.experimental import pallas as pl
from jax.experimental.pallas import tpu as pltpu


def _round_up(x, m):
    return (x + m - 1) // m * m


def _pick_block(dim, target, mult=1):
    """Largest multiple of `mult` that divides `dim` and is <= target (else dim)."""
    if dim <= target:
        return dim
    start = (target // mult) * mult
    for b in range(start, 0, -mult):
        if dim % b == 0:
            return b
    return dim


def _pick_unroll(n, target=8):
    u = min(target, max(n, 1))
    while u > 1 and n % u != 0:
        u -= 1
    return max(u, 1)


# --------------------------------------------------------------------------
# Kernel 1 & 3: tiled GEMM + bias (bf16 MXU operands, f32 accumulate).
# --------------------------------------------------------------------------
def _matmul_bias_kernel(x_ref, w_ref, b_ref, o_ref):
    acc = jnp.dot(x_ref[...].astype(jnp.bfloat16),
                  w_ref[...].astype(jnp.bfloat16),
                  preferred_element_type=jnp.float32)
    o_ref[...] = (acc + b_ref[...]).astype(o_ref.dtype)


def _matmul_bias(x, w, b, *, out_dtype=jnp.float32, tm_target=256, tn_target=512):
    """(M, K) @ (K, N) + (1, N); grid over (M, N) blocks, both axes 'parallel'
    so v7x megacore can shard the FLOP-heavy projections across its 2 TCs."""
    M, K = x.shape
    K2, N = w.shape
    assert K == K2 and b.shape == (1, N)
    tm = _pick_block(M, tm_target, 8)
    tn = _pick_block(N, tn_target, 128)
    grid = (M // tm, N // tn)
    flops = 2 * M * K * N
    bytes_accessed = int(x.size * x.dtype.itemsize + w.size * w.dtype.itemsize
                         + b.size * 4 + M * N * 4)
    return pl.pallas_call(
        _matmul_bias_kernel,
        out_shape=jax.ShapeDtypeStruct((M, N), out_dtype),
        grid=grid,
        in_specs=[
            pl.BlockSpec((tm, K), lambda i, j: (i, 0)),
            pl.BlockSpec((K, tn), lambda i, j: (0, j)),
            pl.BlockSpec((1, tn), lambda i, j: (0, j)),
        ],
        out_specs=pl.BlockSpec((tm, tn), lambda i, j: (i, j)),
        compiler_params=pltpu.CompilerParams(
            dimension_semantics=("parallel", "parallel")),
        cost_estimate=pl.CostEstimate(flops=flops, transcendentals=0,
                                      bytes_accessed=bytes_accessed),
    )(x, w, b)


# --------------------------------------------------------------------------
# Kernel 2: serial LSTM recurrence, time-blocked, h/c carried in VMEM scratch.
# --------------------------------------------------------------------------
def _lstm_recurrence_kernel(gx_ref, whh_ref, h_all_ref, h_scr, c_scr,
                            *, tb, bp, hs, unroll):
    # h/c persist in VMEM scratch across the sequential time-block grid.
    @pl.when(pl.program_id(0) == 0)
    def _():
        h_scr[...] = jnp.zeros_like(h_scr)
        c_scr[...] = jnp.zeros_like(c_scr)

    whh = whh_ref[...]  # (Hs, G4) bf16, hoisted out of the time loop.

    def step(t, carry):
        h, c = carry
        row = pl.multiple_of(t * bp, bp)                  # sublane-aligned
        gates = (gx_ref[pl.ds(row, bp), :]
                 + jnp.dot(h.astype(jnp.bfloat16), whh,
                           preferred_element_type=jnp.float32))
        # Packed gate layout [i | f | g | o], each block `hs` lanes wide
        # (lane-aligned automatically whenever hs % 128 == 0).
        i_g = jax.nn.sigmoid(gates[:, 0 * hs:1 * hs])
        f_g = jax.nn.sigmoid(gates[:, 1 * hs:2 * hs])
        g_g = jnp.tanh(gates[:, 2 * hs:3 * hs])
        o_g = jax.nn.sigmoid(gates[:, 3 * hs:4 * hs])
        c_new = f_g * c + i_g * g_g
        h_new = o_g * jnp.tanh(c_new)
        h_all_ref[pl.ds(row, bp), :] = h_new
        return h_new, c_new

    carry0 = (h_scr[...], c_scr[...])
    h_f, c_f = lax.fori_loop(0, tb, step, carry0, unroll=unroll)
    h_scr[...] = h_f
    c_scr[...] = c_f


def _lstm_recurrence(gx, w_hh, *, seq_len, bp, hs, tb_target=64):
    _, g4 = gx.shape
    tb = _pick_block(seq_len, tb_target, 1)     # timesteps per grid block
    unroll = _pick_unroll(tb, 8)                # modest unroll for LLO overlap
    grid = (seq_len // tb,)
    kernel = functools.partial(_lstm_recurrence_kernel,
                               tb=tb, bp=bp, hs=hs, unroll=unroll)
    flops = int(2 * seq_len * bp * hs * g4 + 10 * seq_len * bp * hs)
    transcendentals = int(5 * seq_len * bp * hs)
    bytes_accessed = int(gx.size * 4 + w_hh.size * 2 + seq_len * bp * hs * 4)
    return pl.pallas_call(
        kernel,
        out_shape=jax.ShapeDtypeStruct((seq_len * bp, hs), jnp.float32),
        grid=grid,
        in_specs=[
            pl.BlockSpec((tb * bp, g4), lambda t: (t, 0)),   # gx time-block
            pl.BlockSpec((hs, g4), lambda t: (0, 0)),        # W_hh (resident)
        ],
        out_specs=pl.BlockSpec((tb * bp, hs), lambda t: (t, 0)),
        scratch_shapes=[
            pltpu.VMEM((bp, hs), jnp.float32),   # h carry
            pltpu.VMEM((bp, hs), jnp.float32),   # c carry
        ],
        compiler_params=pltpu.CompilerParams(
            dimension_semantics=("arbitrary",)),
        cost_estimate=pl.CostEstimate(flops=flops,
                                      transcendentals=transcendentals,
                                      bytes_accessed=bytes_accessed),
    )(gx, w_hh)


# --------------------------------------------------------------------------
# Parameter packing / wrapper.
# --------------------------------------------------------------------------
def _pad_gate_cols(w, h, hs, g4):
    """(..., 4h) -> (..., g4): pack [i,f,g,o] (each padded h->hs cols), pad to g4."""
    pad_block = [(0, 0)] * (w.ndim - 1) + [(0, hs - h)]
    packed = jnp.concatenate(
        [jnp.pad(w[..., k * h:(k + 1) * h], pad_block) for k in range(4)], axis=-1)
    pad_tail = [(0, 0)] * (w.ndim - 1) + [(0, g4 - 4 * hs)]
    return jnp.pad(packed, pad_tail)


def _pack_padded_params(params, *, d, dp, h, hs, g4, v, vp):
    w_ih_p = jnp.pad(_pad_gate_cols(params["w_ih_t"], h, hs, g4),
                     ((0, dp - d), (0, 0))).astype(jnp.bfloat16)        # (Dp, G4)
    w_hh_p = jnp.pad(_pad_gate_cols(params["w_hh_t"], h, hs, g4),
                     ((0, hs - h), (0, 0))).astype(jnp.bfloat16)        # (Hs, G4)
    bg_p = _pad_gate_cols(params["b_gates"], h, hs, g4)                 # (1, G4) f32
    w_out_p = jnp.pad(params["w_out_t"],
                      ((0, hs - h), (0, vp - v))).astype(jnp.bfloat16)  # (Hs, Vp)
    b_out_p = jnp.pad(params["b_out"], ((0, 0), (0, vp - v)))           # (1, Vp) f32
    return w_ih_p, w_hh_p, bg_p, w_out_p, b_out_p


def lstm_language_model(decin, params):
    """decin: (B, T, D) f32. Returns logits (B, T, V) f32."""
    B, T, D = decin.shape
    H = params["w_hh_t"].shape[0]
    V = params["w_out_t"].shape[1]

    Bp = _round_up(B, 8)            # sublanes
    Dp = _round_up(D, 128)          # lanes
    Hs = _round_up(H, 8)            # hidden at sublane granularity (no 4x pad)
    G4 = _round_up(4 * Hs, 128)     # packed [i|f|g|o] slab, lane padded at the end
    Vp = _round_up(V, 128)

    # Time-major, pad batch/feature dims, flatten (T, Bp) into GEMM rows.
    x = jnp.transpose(decin, (1, 0, 2))                    # (T, B, D)
    x = jnp.pad(x, ((0, 0), (0, Bp - B), (0, Dp - D)))     # (T, Bp, Dp)
    x2d = x.reshape(T * Bp, Dp).astype(jnp.bfloat16)

    w_ih_p, w_hh_p, bg_p, w_out_p, b_out_p = _pack_padded_params(
        params, d=D, dp=Dp, h=H, hs=Hs, g4=G4, v=V, vp=Vp)

    # 1) Hoisted input projection: X @ W_ih + b -> (T*Bp, G4) f32 gate pre-acts.
    gx = _matmul_bias(x2d, w_ih_p, bg_p, out_dtype=jnp.float32)

    # 2) Serial LSTM recurrence, blocked over time.
    h_all = _lstm_recurrence(gx, w_hh_p, seq_len=T, bp=Bp, hs=Hs)

    # 3) Hoisted output projection: H_all @ W_out + b_out -> (T*Bp, Vp) logits.
    out2d = _matmul_bias(h_all, w_out_p, b_out_p, out_dtype=jnp.float32)

    out = out2d.reshape(T, Bp, Vp)[:, :B, :V]              # drop padding
    return jnp.transpose(out, (1, 0, 2))                   # (B, T, V)


def model_forward(params, outp_ids, pos_ids, q_ids):
    """Mirrors model.forward((outp, len), (pos, len), (q, len)) -> (B, T, ntoks)."""
    out_e = jnp.take(params["outemb"], outp_ids, axis=0)   # (B, T, esz)
    pos_e = jnp.take(params["posemb"], pos_ids, axis=0)    # (B, T, esz)
    q_e = jnp.take(params["qemb"], q_ids, axis=0)          # (B, T, edgesz)
    decin = jnp.concatenate([out_e, pos_e, q_e], axis=-1)  # (B, T, D)
    return lstm_language_model(decin, params)


def reference_forward(params, outp_ids, pos_ids, q_ids):
    """Pure-JAX reference mirroring the kernel numerics (bf16 MXU operands,
    f32 accumulation / gate math)."""
    out_e = jnp.take(params["outemb"], outp_ids, axis=0)
    pos_e = jnp.take(params["posemb"], pos_ids, axis=0)
    q_e = jnp.take(params["qemb"], q_ids, axis=0)
    decin = jnp.concatenate([out_e, pos_e, q_e], axis=-1)
    decin = jnp.transpose(decin, (1, 0, 2))  # (T, B, D)

    B = decin.shape[1]
    H = params["w_hh_t"].shape[0]
    bf16 = jnp.bfloat16
    w_ih = params["w_ih_t"].astype(bf16)
    w_hh = params["w_hh_t"].astype(bf16)
    w_out = params["w_out_t"].astype(bf16)

    def step(carry, x):
        h, c = carry
        gates = (jnp.dot(x.astype(bf16), w_ih, preferred_element_type=jnp.float32)
                 + jnp.dot(h.astype(bf16), w_hh, preferred_element_type=jnp.float32)
                 + params["b_gates"])
        i = jax.nn.sigmoid(gates[:, 0 * H:1 * H])
        f = jax.nn.sigmoid(gates[:, 1 * H:2 * H])
        g = jnp.tanh(gates[:, 2 * H:3 * H])
        o = jax.nn.sigmoid(gates[:, 3 * H:4 * H])
        c = f * c + i * g
        h = o * jnp.tanh(c)
        logits = (jnp.dot(h.astype(bf16), w_out,
                          preferred_element_type=jnp.float32) + params["b_out"])
        return (h, c), logits

    init = (jnp.zeros((B, H), jnp.float32), jnp.zeros((B, H), jnp.float32))
    _, outs = lax.scan(step, init, decin)   # (T, B, V)
    return jnp.transpose(outs, (1, 0, 2))


def init_params(key, *, ntoks, posembs, rtoks, esz, edgesz, hsize):
    D = 2 * esz + edgesz
    ks = jax.random.split(key, 8)
    scale = 0.1
    return {
        "outemb": scale * jax.random.normal(ks[0], (ntoks, esz), jnp.float32),
        "posemb": scale * jax.random.normal(ks[1], (posembs, esz), jnp.float32),
        "qemb":   scale * jax.random.normal(ks[2], (rtoks, edgesz), jnp.float32),
        # LSTMCell weights stored pre-transposed: (D, 4H) and (H, 4H).
        "w_ih_t": scale * jax.random.normal(ks[3], (D, 4 * hsize), jnp.float32),
        "w_hh_t": scale * jax.random.normal(ks[4], (hsize, 4 * hsize), jnp.float32),
        # combined bias b_ih + b_hh, kept 2-D for clean TPU layout.
        "b_gates": scale * jax.random.normal(ks[5], (1, 4 * hsize), jnp.float32),
        "w_out_t": scale * jax.random.normal(ks[6], (hsize, ntoks), jnp.float32),
        "b_out":  scale * jax.random.normal(ks[7], (1, ntoks), jnp.float32),
    }


if __name__ == "__main__":
    # Small, self-consistent hyperparameters (stand-in for `args`).
    NTOKS = 64      # args.ntoks (output vocab)
    POSEMBS = 20    # args.posembs
    RTOKS = 12      # args.rtoks
    ESZ = 16        # args.esz
    EDGESZ = 16     # args.edgesz
    HSIZE = 32      # args.hsz
    B, T = 2, 8

    key = jax.random.PRNGKey(0)
    kp, ko, kpos, kq = jax.random.split(key, 4)

    params = init_params(kp, ntoks=NTOKS, posembs=POSEMBS, rtoks=RTOKS,
                         esz=ESZ, edgesz=EDGESZ, hsize=HSIZE)

    outp_ids = jax.random.randint(ko, (B, T), 0, NTOKS, jnp.int32)
    pos_ids = jax.random.randint(kpos, (B, T), 0, POSEMBS, jnp.int32)
    q_ids = jax.random.randint(kq, (B, T), 0, RTOKS, jnp.int32)

    out = jax.block_until_ready(model_forward(params, outp_ids, pos_ids, q_ids))
    ref = jax.block_until_ready(
        reference_forward(params, outp_ids, pos_ids, q_ids))

    assert out.shape == (B, T, NTOKS), out.shape
    max_err = float(jnp.max(jnp.abs(out - ref)))
    assert jnp.allclose(out, ref, atol=5e-3, rtol=5e-3), max_err

    print("KERNEL_OK")
</pallas_src>

<mosaic_0001>
module attributes {stable_mosaic.version = 11 : i64} {
  func.func @_matmul_bias_kernel(%arg0: i32, %arg1: i32, %arg2: memref<64x128xbf16, #tpu.memory_space<vmem>>, %arg3: memref<128x128xbf16, #tpu.memory_space<vmem>>, %arg4: memref<1x128xf32, #tpu.memory_space<vmem>>, %arg5: memref<64x128xf32, #tpu.memory_space<vmem>>) attributes {dimension_semantics = [#tpu.dimension_semantics<parallel>, #tpu.dimension_semantics<parallel>], iteration_bounds = array<i64: 1, 1>, scalar_prefetch = 0 : i64, scratch_operands = 0 : i64, tpu.core_type = #tpu.core_type<tc>, window_params = [{transform_indices = @transform_0, window_bounds = array<i64: 64, 128>}, {transform_indices = @transform_1, window_bounds = array<i64: 128, 128>}, {transform_indices = @transform_2, window_bounds = array<i64: 1, 128>}, {transform_indices = @transform_3, window_bounds = array<i64: 64, 128>}]} {
    %c0 = arith.constant 0 : index
    %c0_0 = arith.constant 0 : index
    %0 = vector.load %arg2[%c0, %c0_0] : memref<64x128xbf16, #tpu.memory_space<vmem>>, vector<64x128xbf16>
    %c0_1 = arith.constant 0 : index
    %c0_2 = arith.constant 0 : index
    %1 = vector.load %arg3[%c0_1, %c0_2] : memref<128x128xbf16, #tpu.memory_space<vmem>>, vector<128x128xbf16>
    %cst = arith.constant dense<0.000000e+00> : vector<64x128xf32>
    %2 = tpu.matmul %0, %1, %cst {dimension_numbers = #tpu.dot_dimension_numbers<[1], [0], [0], [1], [0, 0, 1, 1], [], []>} : vector<64x128xbf16>, vector<128x128xbf16>, vector<64x128xf32> -> vector<64x128xf32>
    %c0_3 = arith.constant 0 : index
    %c0_4 = arith.constant 0 : index
    %3 = vector.load %arg4[%c0_3, %c0_4] : memref<1x128xf32, #tpu.memory_space<vmem>>, vector<1x128xf32>
    %4 = vector.broadcast %3 : vector<1x128xf32> to vector<64x128xf32>
    %5 = arith.addf %2, %4 : vector<64x128xf32>
    %c0_5 = arith.constant 0 : index
    %c0_6 = arith.constant 0 : index
    %6 = vector.load %arg5[%c0_5, %c0_6] : memref<64x128xf32, #tpu.memory_space<vmem>>, vector<64x128xf32>
    tpu.vector_store %arg5[%c0_5, %c0_6], %5 {strides = array<i32>} : memref<64x128xf32, #tpu.memory_space<vmem>>, vector<64x128xf32>,
    return
  }
  func.func @transform_0(%arg0: i32, %arg1: i32) -> (i32, i32) {
    %c0_i32 = arith.constant 0 : i32
    %c0_i32_0 = arith.constant 0 : i32
    return %arg0, %c0_i32 : i32, i32
  }
  func.func @transform_1(%arg0: i32, %arg1: i32) -> (i32, i32) {
    %c0_i32 = arith.constant 0 : i32
    %c0_i32_0 = arith.constant 0 : i32
    return %c0_i32, %arg1 : i32, i32
  }
  func.func @transform_2(%arg0: i32, %arg1: i32) -> (i32, i32) {
    %c0_i32 = arith.constant 0 : i32
    %c0_i32_0 = arith.constant 0 : i32
    return %c0_i32, %arg1 : i32, i32
  }
  func.func @transform_3(%arg0: i32, %arg1: i32) -> (i32, i32) {
    %c0_i32 = arith.constant 0 : i32
    return %arg0, %arg1 : i32, i32
  }
}

</mosaic_0001>

<llo_original>
// kernel: tpu_custom_call.1
$region0: #{tpu_custom_call.1}
  #allocation0 [shape = 'u32[]', space=smem, size = 0x4, offset = 0x4, fixed_abs, tag = 'smem constant byte address 0x4 - core index']
  #allocation1 [shape = 'u32[72,128]{1,0:T(1,128)}', space=vmem, size = 0x9000, scoped, tag = 'internal scratch']
  %s0 = inlined_call_operand.hbm [shape: bf16[64,128], index: 0, kind: input, shape index: {}]
  %s1 = inlined_call_operand.hbm [shape: bf16[128,128], index: 1, kind: input, shape index: {}]
  %s2 = inlined_call_operand.vmem [shape: f32[1,128], index: 2, kind: input, shape index: {}]
  %s3 = inlined_call_operand.hbm [shape: f32[64,128], index: 3, kind: output, shape index: {}]
  %s4 = sld [smem:[#allocation0]]
  $region30: #{tpu_custom_call.1} parent=0
    _
  %s6 = ssub.s32 1, %s4
  %s7 = scalar_select 0, %s6, %s4
  $region1: #{tpu_custom_call.1} parent=0
    #allocation2 [shape = 'u8[16384]{0}', space=vmem, size = 0x4000, scoped, tag = 'input window, operand 0, single buffered']
    #allocation3 [shape = 's32[1]{0}', space=sflag, size = 0x4, scoped, tag = 'scoped memory for tpu_custom_call.1']
    #allocation4 [shape = 's32[1]{0}', space=sflag, size = 0x4, scoped, tag = 'scoped memory for tpu_custom_call.1']
    #allocation5 [shape = 'u8[32768]{0}', space=vmem, size = 0x8000, scoped, tag = 'input window, operand 1, single buffered']
    #allocation6 [shape = 's32[1]{0}', space=sflag, size = 0x4, scoped, tag = 'scoped memory for tpu_custom_call.1']
    #allocation7 [shape = 'u8[32768]{0}', space=vmem, size = 0x8000, scoped, tag = 'output window, operand 0, single buffered']
    %8 = vsyncpa [#allocation3], 0
    %9 = vsyncpa [#allocation6], 0
    %10 = vsyncpa [#allocation4], 0
    // Predicated region
    $region2: #{tpu_custom_call.1} parent=1 // pred_check
      _
    $region3: #{tpu_custom_call.1} parent=1 // pred_check_branch
      %12 = sbr.rel (0) target = $region5
    $region4: #{tpu_custom_call.1} parent=1 // pred_region
      %14 = vsyncadd [#allocation3], 0
      %s15 = sshll.u32 %s0, 4
      %s16 = int_to_ptr.hbm [resolvable:$true] %s15
      %s17 = sshll.u32 [#allocation2], 4
      %s18 = int_to_ptr.vmem [resolvable:$true] %s17
      %23 = dma.hbm_to_vmem [thread:$0]  %s16, 512, %s18, [#allocation3], 64, 64, 4
    $region5: #{tpu_custom_call.1} parent=1 // pred_fallthru
      _
    // Predicated region
    $region6: #{tpu_custom_call.1} parent=1 // pred_check
      _
    $region7: #{tpu_custom_call.1} parent=1 // pred_check_branch
      %25 = sbr.rel (0) target = $region9
    $region8: #{tpu_custom_call.1} parent=1 // pred_region
      %27 = vsyncadd [#allocation6], 0
      %s28 = sshll.u32 %s1, 4
      %s29 = int_to_ptr.hbm [resolvable:$true] %s28
      %s30 = sshll.u32 [#allocation5], 4
      %s31 = int_to_ptr.vmem [resolvable:$true] %s30
      %36 = dma.hbm_to_vmem [thread:$0]  %s29, 1024, %s31, [#allocation6], 64, 64, 4
    $region9: #{tpu_custom_call.1} parent=1 // pred_fallthru
      _
    // Predicated region
    $region10: #{tpu_custom_call.1} parent=1 // pred_check
      _
    $region11: #{tpu_custom_call.1} parent=1 // pred_check_branch
      %38 = sbr.rel (0) target = $region13
    $region12: #{tpu_custom_call.1} parent=1 // pred_region
      _
    $region13: #{tpu_custom_call.1} parent=1 // pred_fallthru
      _
    // Predicated region
    $region14: #{tpu_custom_call.1} parent=1 // pred_check
      _
    $region15: #{tpu_custom_call.1} parent=1 // pred_check_branch
      %40 = sbr.rel (0) target = $region17
    $region16: #{tpu_custom_call.1} parent=1 // pred_region
      %42 = dma.done [#allocation3], 512
    $region17: #{tpu_custom_call.1} parent=1 // pred_fallthru
      _
    // Predicated region
    $region18: #{tpu_custom_call.1} parent=1 // pred_check
      _
    $region19: #{tpu_custom_call.1} parent=1 // pred_check_branch
      %44 = sbr.rel (0) target = $region21
    $region20: #{tpu_custom_call.1} parent=1 // pred_region
      %46 = dma.done [#allocation6], 1024
    $region21: #{tpu_custom_call.1} parent=1 // pred_fallthru
      _
    %v47 = vld [vmem:[#allocation2] sm:$0xf]
    %v48 = vld [vmem:[#allocation2 + $0x4] sm:$0xf]
    %v49 = vld [vmem:[#allocation2 + $0x8] sm:$0xf]
    %v50 = vld [vmem:[#allocation2 + $0xc] sm:$0xf]
    %v51 = vld [vmem:[#allocation2 + $0x10] sm:$0xf]
    %v52 = vld [vmem:[#allocation2 + $0x14] sm:$0xf]
    %v53 = vld [vmem:[#allocation2 + $0x18] sm:$0xf]
    %v54 = vld [vmem:[#allocation2 + $0x1c] sm:$0xf]
    %v55 = vld [vmem:[#allocation5] sm:$0xf]
    %v56 = vld [vmem:[#allocation5 + $0x4] sm:$0xf]
    %v57 = vld [vmem:[#allocation5 + $0x8] sm:$0xf]
    %v58 = vld [vmem:[#allocation5 + $0xc] sm:$0xf]
    %v59 = vld [vmem:[#allocation5 + $0x10] sm:$0xf]
    %v60 = vld [vmem:[#allocation5 + $0x14] sm:$0xf]
    %v61 = vld [vmem:[#allocation5 + $0x18] sm:$0xf]
    %v62 = vld [vmem:[#allocation5 + $0x1c] sm:$0xf]
    %v63 = vld [vmem:[#allocation5 + $0x20] sm:$0xf]
    %v64 = vld [vmem:[#allocation5 + $0x24] sm:$0xf]
    %v65 = vld [vmem:[#allocation5 + $0x28] sm:$0xf]
    %v66 = vld [vmem:[#allocation5 + $0x2c] sm:$0xf]
    %v67 = vld [vmem:[#allocation5 + $0x30] sm:$0xf]
    %v68 = vld [vmem:[#allocation5 + $0x34] sm:$0xf]
    %v69 = vld [vmem:[#allocation5 + $0x38] sm:$0xf]
    %v70 = vld [vmem:[#allocation5 + $0x3c] sm:$0xf]
    %v71 = vld [vmem:[%s2] sm:$0x1]
    %v73 = vperm.slane %v71, 0
    %v83 = vunpack.c.l.b16 %v47
    %v84 = vunpack.c.l.b16 %v48
    %v85 = vunpack.c.l.b16 %v49
    %v86 = vunpack.c.l.b16 %v50
    %v87 = vunpack.c.l.b16 %v51
    %v88 = vunpack.c.l.b16 %v52
    %v89 = vunpack.c.l.b16 %v53
    %v90 = vunpack.c.l.b16 %v54
    %v91 = vpack.c.b16 %v84, %v83
    %v92 = vpack.c.b16 %v86, %v85
    %v93 = vpack.c.b16 %v88, %v87
    %v94 = vpack.c.b16 %v90, %v89
    %v115 = vunpack.c.l.b16 %v55
    %v116 = vunpack.c.l.b16 %v56
    %v117 = vunpack.c.l.b16 %v57
    %v118 = vunpack.c.l.b16 %v58
    %v119 = vunpack.c.l.b16 %v59
    %v120 = vunpack.c.l.b16 %v60
    %v121 = vunpack.c.l.b16 %v61
    %v122 = vunpack.c.l.b16 %v62
    %v123 = vunpack.c.l.b16 %v63
    %v124 = vunpack.c.l.b16 %v64
    %v125 = vunpack.c.l.b16 %v65
    %v126 = vunpack.c.l.b16 %v66
    %v127 = vunpack.c.l.b16 %v67
    %v128 = vunpack.c.l.b16 %v68
    %v129 = vunpack.c.l.b16 %v69
    %v130 = vunpack.c.l.b16 %v70
    %v131 = vpack.c.b16 %v116, %v115
    %v132 = vpack.c.b16 %v118, %v117
    %v133 = vpack.c.b16 %v120, %v119
    %v134 = vpack.c.b16 %v122, %v121
    %v135 = vpack.c.b16 %v124, %v123
    %v136 = vpack.c.b16 %v126, %v125
    %v137 = vpack.c.b16 %v128, %v127
    %v138 = vpack.c.b16 %v130, %v129
    %147 = vmatpush.bf16.msra.mxu0 %v138
    %148 = vmatpush.bf16.msra.mxu0 %v137
    %149 = vmatpush.bf16.msra.mxu0 %v136
    %150 = vmatpush.bf16.msra.mxu0 %v135
    %151 = vmatpush.bf16.msra.mxu0 %v134
    %152 = vmatpush.bf16.msra.mxu0 %v133
    %153 = vmatpush.bf16.msra.mxu0 %v132
    %154 = vmatpush.bf16.msra.mxu0 %v131
    %155 = vmatmul.bf16.gmra.mxu0 %v91
    %v156 = vpop.f32.mrf.mxu0
    %v157 = vadd.f32 %v73, %v156
    %v158 = vpop.f32.mrf.mxu0
    %v159 = vadd.f32 %v73, %v158
    %160 = vmatmul.bf16.gmra.mxu0 %v92
    %v161 = vpop.f32.mrf.mxu0
    %v162 = vadd.f32 %v73, %v161
    %v163 = vpop.f32.mrf.mxu0
    %v164 = vadd.f32 %v73, %v163
    %165 = vmatmul.bf16.gmra.mxu0 %v93
    %v166 = vpop.f32.mrf.mxu0
    %v167 = vadd.f32 %v73, %v166
    %v168 = vpop.f32.mrf.mxu0
    %v169 = vadd.f32 %v73, %v168
    %170 = vmatmul.bf16.gmra.mxu0 %v94
    %v171 = vpop.f32.mrf.mxu0
    %v172 = vadd.f32 %v73, %v171
    %v173 = vpop.f32.mrf.mxu0
    %v174 = vadd.f32 %v73, %v173
    %175 = vdwg.mxu0
    %176 = vst [vmem:[#allocation7] sm:$0xff] %v157
    %177 = vst [vmem:[#allocation7 + $0x8] sm:$0xff] %v159
    %178 = vst [vmem:[#allocation7 + $0x10] sm:$0xff] %v162
    %179 = vst [vmem:[#allocation7 + $0x18] sm:$0xff] %v164
    %180 = vst [vmem:[#allocation7 + $0x20] sm:$0xff] %v167
    %181 = vst [vmem:[#allocation7 + $0x28] sm:$0xff] %v169
    %182 = vst [vmem:[#allocation7 + $0x30] sm:$0xff] %v172
    %183 = vst [vmem:[#allocation7 + $0x38] sm:$0xff] %v174
    // Predicated region
    $region22: #{tpu_custom_call.1} parent=1 // pred_check
      _
    $region23: #{tpu_custom_call.1} parent=1 // pred_check_branch
      %185 = sbr.rel (0) target = $region25
    $region24: #{tpu_custom_call.1} parent=1 // pred_region
      %187 = vsyncadd [#allocation4], 0
      %s188 = sshll.u32 [#allocation7], 4
      %s189 = int_to_ptr.vmem [resolvable:$true] %s188
      %s190 = sshll.u32 %s3, 4
      %s191 = int_to_ptr.hbm [resolvable:$true] %s190
      %196 = dma.vmem_to_hbm [thread:$0]  %s189, 1024, %s191, [#allocation4], 128, 128, 8
    $region25: #{tpu_custom_call.1} parent=1 // pred_fallthru
      _
    // Predicated region
    $region26: #{tpu_custom_call.1} parent=1 // pred_check
      _
    $region27: #{tpu_custom_call.1} parent=1 // pred_check_branch
      %198 = sbr.rel (0) target = $region29
    $region28: #{tpu_custom_call.1} parent=1 // pred_region
      %200 = dma.done [#allocation4], 1024
    $region29: #{tpu_custom_call.1} parent=1 // pred_fallthru
      _
    %201 = vsyncpa [#allocation3], 1
    %202 = vsyncpa [#allocation6], 1
    %203 = vsyncpa [#allocation4], 1

</llo_original>
